<compile_context>
chip_gen: v7x
topology: tpu7x:2x2x1
jax: 0.10.0
libtpu: 0.0.40
codegen_flags: <defaults>
</compile_context>

<pallas_src>
import time
import functools
import numpy as np
import jax
import jax.numpy as jnp
from jax.experimental import pallas as pl
from jax.experimental.pallas import tpu as pltpu


# --------------------------------------------------------------------------
# Host-side constant operands
# --------------------------------------------------------------------------
def _centered_idft_matrix(n: int) -> np.ndarray:
    """(n,n) complex M with M @ x == fftshift(ifft(ifftshift(x), norm=None))*sqrt(n)."""
    k = np.arange(n)
    w = np.exp(2j * np.pi * np.outer(k, k) / n) / np.sqrt(n)
    p_f = np.eye(n)[np.fft.fftshift(k), :]
    p_i = np.eye(n)[np.fft.ifftshift(k), :]
    return p_f @ w @ p_i


def _build_dft_operands(h: int, w: int):
    # Stage 1: (2W, 2W) real matrix acting on interleaved (re, im) lanes,
    # producing [T_r | T_i] with T = X_complex @ M_W^T.
    m_w_t = _centered_idft_matrix(w).T                       # (W, W), pre-transposed
    a_w = np.zeros((2 * w, 2 * w), np.float32)
    a_w[0::2, :w] = m_w_t.real
    a_w[1::2, :w] = -m_w_t.imag
    a_w[0::2, w:] = m_w_t.imag
    a_w[1::2, w:] = m_w_t.real
    # Stage 2: [M_H.real; M_H.imag] stacked along rows -> (2H, H).
    m_h = _centered_idft_matrix(h)
    b_h = np.concatenate([m_h.real, m_h.imag], axis=0).astype(np.float32)
    return jnp.asarray(a_w), jnp.asarray(b_h)


# --------------------------------------------------------------------------
# Pallas kernel: centered 2-D inverse DFT (via matmuls) + coil RSS
# --------------------------------------------------------------------------
def _ifft2c_rss_kernel(x_ref, aw_ref, bh_ref, o_ref, *, tn, c, h, w):
    # x_ref : (tn*c*h, 2w)  interleaved (re, im) k-space rows for tn frames
    # aw_ref: (2w, 2w)      stage-1 (W-axis) combined IDFT operand
    # bh_ref: (2h, h)       stage-2 (H-axis) stacked [real; imag] IDFT operand
    # o_ref : (tn, h, w)    RSS image per frame
    # Stage 1: one big matmul over all frames/coils/rows of this tile.
    z = jnp.dot(x_ref[...], aw_ref[...],
                preferred_element_type=jnp.float32)          # (tn*c*h, 2w) = [T_r | T_i]
    bh = bh_ref[...]                                          # (2h, h)

    # Stage 2 + RSS: per (frame, coil) slab, one (2H,H)@(H,2W) matmul,
    # then VPU combines and sum-of-squares accumulation over coils.
    for f in range(tn):
        acc = jnp.zeros((h, w), jnp.float32)
        for ci in range(c):
            r0 = (f * c + ci) * h
            zb = z[r0:r0 + h, :]                              # (h, 2w)
            q = jnp.dot(bh, zb,
                        preferred_element_type=jnp.float32)   # (2h, 2w)
            p1 = q[:h, :]                                     # [Mhr@Tr | Mhr@Ti]
            p2 = q[h:, :]                                     # [Mhi@Tr | Mhi@Ti]
            y_r = p1[:, :w] - p2[:, w:]
            y_i = p2[:, :w] + p1[:, w:]
            acc = acc + y_r * y_r + y_i * y_i
        o_ref[f] = jnp.sqrt(acc)


def _choose_frame_tile(n, c, h, w, target_bytes=8 << 20):
    """Pick frames-per-grid-step: fill VMEM, but keep >=2 steps for v7x's 2 TCs."""
    per_frame = c * h * 2 * w * 4                             # f32 input bytes / frame
    tn = max(1, int(target_bytes // max(per_frame, 1)))
    tn = min(tn, n)
    if n >= 2:
        tn = min(tn, (n + 1) // 2)
    while n % tn:
        tn -= 1
    if (tn * c * h) % 8 != 0:                                 # (8,128) sublane rule
        tn = n                                                # full-extent block is always legal
    return tn


def ifft2c_rss(masked_kspace: jax.Array) -> jax.Array:
    """images = ifft2c(masked_kspace, norm=None) * sqrt(H*W);
       zero_filled = rss_complex(images, dim=2)  -> (B, T, H, W)."""
    B, T, C, H, W, two = masked_kspace.shape
    assert two == 2
    n = B * T

    # Free contiguous reshape; no strided real/imag extraction in the wrapper.
    x2d = masked_kspace.reshape(n * C * H, 2 * W).astype(jnp.float32)
    a_w, b_h = _build_dft_operands(H, W)

    tn = _choose_frame_tile(n, C, H, W)
    grid = (n // tn,)
    rows = tn * C * H

    kernel = functools.partial(_ifft2c_rss_kernel, tn=tn, c=C, h=H, w=W)
    out = pl.pallas_call(
        kernel,
        out_shape=jax.ShapeDtypeStruct((n, H, W), jnp.float32),
        grid_spec=pltpu.PrefetchScalarGridSpec(
            num_scalar_prefetch=0,
            grid=grid,
            in_specs=[
                pl.BlockSpec((rows, 2 * W), lambda i: (i, 0)),
                # Constant-index operands: fetched once, stay resident in VMEM.
                pl.BlockSpec((2 * W, 2 * W), lambda i: (0, 0)),
                pl.BlockSpec((2 * H, H), lambda i: (0, 0)),
            ],
            out_specs=pl.BlockSpec((tn, H, W), lambda i: (i, 0, 0)),
        ),
        compiler_params=pltpu.CompilerParams(
            dimension_semantics=("parallel",)),
    )(x2d, a_w, b_h)

    return out.reshape(B, T, H, W)


# --------------------------------------------------------------------------
# Glue (plain JAX/NumPy): center cropping, as in center_crop_to_smallest
# --------------------------------------------------------------------------
def _center_crop(x, shape):
    h, w = shape
    H, W = x.shape[-2], x.shape[-1]
    top = (H - h) // 2
    left = (W - w) // 2
    return x[..., top:top + h, left:left + w]


def center_crop_to_smallest(a, b):
    h = min(a.shape[-2], b.shape[-2])
    w = min(a.shape[-1], b.shape[-1])
    return _center_crop(a, (h, w)), _center_crop(b, (h, w))


# --------------------------------------------------------------------------
# InferenceTransform.forward equivalent
# --------------------------------------------------------------------------
def inference_transform_forward(masked_kspace, mask, target):
    model_time_start = time.time()
    # TODO(synk): self.model(masked_kspace, mask) is an arbitrary trained network
    # (varnet/cinenet/xpdnet) with no generic Pallas equivalent; skipped here.
    model_time_end = time.time()

    zero_filled = ifft2c_rss(masked_kspace)          # Pallas hot path
    target_c, zero_filled_c = center_crop_to_smallest(target, zero_filled)
    # TODO(synk): np.save file-writing side effects are host I/O, not kernel work.
    return target_c, zero_filled_c, model_time_end - model_time_start


# --------------------------------------------------------------------------
# NumPy reference for correctness checking
# --------------------------------------------------------------------------
def _reference_zero_filled(kspace_np):
    x = kspace_np[..., 0] + 1j * kspace_np[..., 1]        # (B, T, C, H, W)
    H, W = x.shape[-2], x.shape[-1]
    img = np.fft.fftshift(
        np.fft.ifft2(np.fft.ifftshift(x, axes=(-2, -1)), axes=(-2, -1), norm=None),
        axes=(-2, -1)) * np.sqrt(H * W)
    return np.sqrt(np.sum(np.abs(img) ** 2, axis=2)).astype(np.float32)


if __name__ == "__main__":
    key = jax.random.PRNGKey(0)
    k1, k2 = jax.random.split(key)

    B, T, C, H, W = 1, 2, 4, 16, 16
    masked_kspace = jax.random.normal(k1, (B, T, C, H, W, 2), dtype=jnp.float32)
    mask = jnp.ones((B, 1, 1, 1, W, 1), dtype=jnp.float32)
    target = jax.random.normal(k2, (B, T, 12, 12), dtype=jnp.float32)

    target_c, zero_filled_c, _dt = inference_transform_forward(masked_kspace, mask, target)
    zero_filled_c = jax.block_until_ready(zero_filled_c)

    # Verify against NumPy reference of ifft2c * sqrt(H*W) + rss + crop.
    ref = _reference_zero_filled(np.asarray(masked_kspace))
    _, ref_c = center_crop_to_smallest(np.asarray(target), ref)
    np.testing.assert_allclose(np.asarray(zero_filled_c), ref_c, rtol=1e-4, atol=1e-5)
    assert target_c.shape == (B, T, 12, 12) and zero_filled_c.shape == (B, T, 12, 12)

    print("KERNEL_OK")
</pallas_src>

<mosaic_0001>
module attributes {stable_mosaic.version = 11 : i64} {
  func.func @_ifft2c_rss_kernel(%arg0: i32, %arg1: memref<64x32xf32, #tpu.memory_space<vmem>>, %arg2: memref<32x32xf32, #tpu.memory_space<vmem>>, %arg3: memref<32x16xf32, #tpu.memory_space<vmem>>, %arg4: memref<1x16x16xf32, #tpu.memory_space<vmem>>) attributes {dimension_semantics = [#tpu.dimension_semantics<parallel>], iteration_bounds = array<i64: 2>, scalar_prefetch = 0 : i64, scratch_operands = 0 : i64, tpu.core_type = #tpu.core_type<tc>, window_params = [{transform_indices = @transform_0, window_bounds = array<i64: 64, 32>}, {pipeline_mode = #tpu.pipeline_mode<synchronous>, transform_indices = @transform_1, window_bounds = array<i64: 32, 32>}, {pipeline_mode = #tpu.pipeline_mode<synchronous>, transform_indices = @transform_2, window_bounds = array<i64: 32, 16>}, {transform_indices = @transform_3, window_bounds = array<i64: 1, 16, 16>}]} {
    %c0 = arith.constant 0 : index
    %c0_0 = arith.constant 0 : index
    %0 = vector.load %arg1[%c0, %c0_0] : memref<64x32xf32, #tpu.memory_space<vmem>>, vector<64x32xf32>
    %c0_1 = arith.constant 0 : index
    %c0_2 = arith.constant 0 : index
    %1 = vector.load %arg2[%c0_1, %c0_2] : memref<32x32xf32, #tpu.memory_space<vmem>>, vector<32x32xf32>
    %cst = arith.constant dense<0.000000e+00> : vector<64x32xf32>
    %2 = tpu.matmul %0, %1, %cst {dimension_numbers = #tpu.dot_dimension_numbers<[1], [0], [0], [1], [0, 0, 1, 1], [], []>} : vector<64x32xf32>, vector<32x32xf32>, vector<64x32xf32> -> vector<64x32xf32>
    %c0_3 = arith.constant 0 : index
    %c0_4 = arith.constant 0 : index
    %3 = vector.load %arg3[%c0_3, %c0_4] : memref<32x16xf32, #tpu.memory_space<vmem>>, vector<32x16xf32>
    %cst_5 = arith.constant 0.000000e+00 : f32
    %4 = vector.broadcast %cst_5 : f32 to vector<16x16xf32>
    %5 = vector.extract_strided_slice %2 {offsets = [0, 0], sizes = [16, 32], strides = [1, 1]} : vector<64x32xf32> to vector<16x32xf32>
    %cst_6 = arith.constant dense<0.000000e+00> : vector<32x32xf32>
    %6 = tpu.matmul %3, %5, %cst_6 {dimension_numbers = #tpu.dot_dimension_numbers<[1], [0], [0], [1], [0, 0, 1, 1], [], []>} : vector<32x16xf32>, vector<16x32xf32>, vector<32x32xf32> -> vector<32x32xf32>
    %7 = vector.extract_strided_slice %6 {offsets = [0, 0], sizes = [16, 32], strides = [1, 1]} : vector<32x32xf32> to vector<16x32xf32>
    %8 = vector.extract_strided_slice %6 {offsets = [16, 0], sizes = [16, 32], strides = [1, 1]} : vector<32x32xf32> to vector<16x32xf32>
    %9 = vector.extract_strided_slice %7 {offsets = [0, 0], sizes = [16, 16], strides = [1, 1]} : vector<16x32xf32> to vector<16x16xf32>
    %10 = vector.extract_strided_slice %8 {offsets = [0, 16], sizes = [16, 16], strides = [1, 1]} : vector<16x32xf32> to vector<16x16xf32>
    %11 = arith.subf %9, %10 : vector<16x16xf32>
    %12 = vector.extract_strided_slice %8 {offsets = [0, 0], sizes = [16, 16], strides = [1, 1]} : vector<16x32xf32> to vector<16x16xf32>
    %13 = vector.extract_strided_slice %7 {offsets = [0, 16], sizes = [16, 16], strides = [1, 1]} : vector<16x32xf32> to vector<16x16xf32>
    %14 = arith.addf %12, %13 : vector<16x16xf32>
    %15 = arith.mulf %11, %11 : vector<16x16xf32>
    %16 = arith.addf %4, %15 : vector<16x16xf32>
    %17 = arith.mulf %14, %14 : vector<16x16xf32>
    %18 = arith.addf %16, %17 : vector<16x16xf32>
    %19 = vector.extract_strided_slice %2 {offsets = [16, 0], sizes = [16, 32], strides = [1, 1]} : vector<64x32xf32> to vector<16x32xf32>
    %cst_7 = arith.constant dense<0.000000e+00> : vector<32x32xf32>
    %20 = tpu.matmul %3, %19, %cst_7 {dimension_numbers = #tpu.dot_dimension_numbers<[1], [0], [0], [1], [0, 0, 1, 1], [], []>} : vector<32x16xf32>, vector<16x32xf32>, vector<32x32xf32> -> vector<32x32xf32>
    %21 = vector.extract_strided_slice %20 {offsets = [0, 0], sizes = [16, 32], strides = [1, 1]} : vector<32x32xf32> to vector<16x32xf32>
    %22 = vector.extract_strided_slice %20 {offsets = [16, 0], sizes = [16, 32], strides = [1, 1]} : vector<32x32xf32> to vector<16x32xf32>
    %23 = vector.extract_strided_slice %21 {offsets = [0, 0], sizes = [16, 16], strides = [1, 1]} : vector<16x32xf32> to vector<16x16xf32>
    %24 = vector.extract_strided_slice %22 {offsets = [0, 16], sizes = [16, 16], strides = [1, 1]} : vector<16x32xf32> to vector<16x16xf32>
    %25 = arith.subf %23, %24 : vector<16x16xf32>
    %26 = vector.extract_strided_slice %22 {offsets = [0, 0], sizes = [16, 16], strides = [1, 1]} : vector<16x32xf32> to vector<16x16xf32>
    %27 = vector.extract_strided_slice %21 {offsets = [0, 16], sizes = [16, 16], strides = [1, 1]} : vector<16x32xf32> to vector<16x16xf32>
    %28 = arith.addf %26, %27 : vector<16x16xf32>
    %29 = arith.mulf %25, %25 : vector<16x16xf32>
    %30 = arith.addf %18, %29 : vector<16x16xf32>
    %31 = arith.mulf %28, %28 : vector<16x16xf32>
    %32 = arith.addf %30, %31 : vector<16x16xf32>
    %33 = vector.extract_strided_slice %2 {offsets = [32, 0], sizes = [16, 32], strides = [1, 1]} : vector<64x32xf32> to vector<16x32xf32>
    %cst_8 = arith.constant dense<0.000000e+00> : vector<32x32xf32>
    %34 = tpu.matmul %3, %33, %cst_8 {dimension_numbers = #tpu.dot_dimension_numbers<[1], [0], [0], [1], [0, 0, 1, 1], [], []>} : vector<32x16xf32>, vector<16x32xf32>, vector<32x32xf32> -> vector<32x32xf32>
    %35 = vector.extract_strided_slice %34 {offsets = [0, 0], sizes = [16, 32], strides = [1, 1]} : vector<32x32xf32> to vector<16x32xf32>
    %36 = vector.extract_strided_slice %34 {offsets = [16, 0], sizes = [16, 32], strides = [1, 1]} : vector<32x32xf32> to vector<16x32xf32>
    %37 = vector.extract_strided_slice %35 {offsets = [0, 0], sizes = [16, 16], strides = [1, 1]} : vector<16x32xf32> to vector<16x16xf32>
    %38 = vector.extract_strided_slice %36 {offsets = [0, 16], sizes = [16, 16], strides = [1, 1]} : vector<16x32xf32> to vector<16x16xf32>
    %39 = arith.subf %37, %38 : vector<16x16xf32>
    %40 = vector.extract_strided_slice %36 {offsets = [0, 0], sizes = [16, 16], strides = [1, 1]} : vector<16x32xf32> to vector<16x16xf32>
    %41 = vector.extract_strided_slice %35 {offsets = [0, 16], sizes = [16, 16], strides = [1, 1]} : vector<16x32xf32> to vector<16x16xf32>
    %42 = arith.addf %40, %41 : vector<16x16xf32>
    %43 = arith.mulf %39, %39 : vector<16x16xf32>
    %44 = arith.addf %32, %43 : vector<16x16xf32>
    %45 = arith.mulf %42, %42 : vector<16x16xf32>
    %46 = arith.addf %44, %45 : vector<16x16xf32>
    %47 = vector.extract_strided_slice %2 {offsets = [48, 0], sizes = [16, 32], strides = [1, 1]} : vector<64x32xf32> to vector<16x32xf32>
    %cst_9 = arith.constant dense<0.000000e+00> : vector<32x32xf32>
    %48 = tpu.matmul %3, %47, %cst_9 {dimension_numbers = #tpu.dot_dimension_numbers<[1], [0], [0], [1], [0, 0, 1, 1], [], []>} : vector<32x16xf32>, vector<16x32xf32>, vector<32x32xf32> -> vector<32x32xf32>
    %49 = vector.extract_strided_slice %48 {offsets = [0, 0], sizes = [16, 32], strides = [1, 1]} : vector<32x32xf32> to vector<16x32xf32>
    %50 = vector.extract_strided_slice %48 {offsets = [16, 0], sizes = [16, 32], strides = [1, 1]} : vector<32x32xf32> to vector<16x32xf32>
    %51 = vector.extract_strided_slice %49 {offsets = [0, 0], sizes = [16, 16], strides = [1, 1]} : vector<16x32xf32> to vector<16x16xf32>
    %52 = vector.extract_strided_slice %50 {offsets = [0, 16], sizes = [16, 16], strides = [1, 1]} : vector<16x32xf32> to vector<16x16xf32>
    %53 = arith.subf %51, %52 : vector<16x16xf32>
    %54 = vector.extract_strided_slice %50 {offsets = [0, 0], sizes = [16, 16], strides = [1, 1]} : vector<16x32xf32> to vector<16x16xf32>
    %55 = vector.extract_strided_slice %49 {offsets = [0, 16], sizes = [16, 16], strides = [1, 1]} : vector<16x32xf32> to vector<16x16xf32>
    %56 = arith.addf %54, %55 : vector<16x16xf32>
    %57 = arith.mulf %53, %53 : vector<16x16xf32>
    %58 = arith.addf %46, %57 : vector<16x16xf32>
    %59 = arith.mulf %56, %56 : vector<16x16xf32>
    %60 = arith.addf %58, %59 : vector<16x16xf32>
    %61 = math.sqrt %60 : vector<16x16xf32>
    %c0_10 = arith.constant 0 : index
    %c0_11 = arith.constant 0 : index
    %c0_12 = arith.constant 0 : index
    %62 = vector.load %arg4[%c0_10, %c0_11, %c0_12] : memref<1x16x16xf32, #tpu.memory_space<vmem>>, vector<1x16x16xf32>
    %63 = vector.shape_cast %62 : vector<1x16x16xf32> to vector<16x16xf32>
    %64 = vector.shape_cast %61 : vector<16x16xf32> to vector<1x16x16xf32>
    tpu.vector_store %arg4[%c0_10, %c0_11, %c0_12], %64 {strides = array<i32>} : memref<1x16x16xf32, #tpu.memory_space<vmem>>, vector<1x16x16xf32>,
    return
  }
  func.func @transform_0(%arg0: i32) -> (i32, i32) {
    %c0_i32 = arith.constant 0 : i32
    %c0_i32_0 = arith.constant 0 : i32
    return %arg0, %c0_i32 : i32, i32
  }
  func.func @transform_1(%arg0: i32) -> (i32, i32) {
    %c0_i32 = arith.constant 0 : i32
    %c0_i32_0 = arith.constant 0 : i32
    %c0_i32_1 = arith.constant 0 : i32
    return %c0_i32, %c0_i32_0 : i32, i32
  }
  func.func @transform_2(%arg0: i32) -> (i32, i32) {
    %c0_i32 = arith.constant 0 : i32
    %c0_i32_0 = arith.constant 0 : i32
    %c0_i32_1 = arith.constant 0 : i32
    return %c0_i32, %c0_i32_0 : i32, i32
  }
  func.func @transform_3(%arg0: i32) -> (i32, i32, i32) {
    %c0_i32 = arith.constant 0 : i32
    %c0_i32_0 = arith.constant 0 : i32
    %c0_i32_1 = arith.constant 0 : i32
    return %arg0, %c0_i32, %c0_i32_0 : i32, i32, i32
  }
}

</mosaic_0001>

<llo_original>
// kernel: tpu_custom_call.1
$region0: #{tpu_custom_call.1}
  #allocation0 [shape = 'u32[]', space=smem, size = 0x4, offset = 0x4, fixed_abs, tag = 'smem constant byte address 0x4 - core index']
  #allocation1 [shape = 'u32[144,128]{1,0:T(1,128)}', space=vmem, size = 0x12000, scoped, tag = 'internal scratch']
  %s0 = inlined_call_operand.vmem [shape: f32[128,32], index: 0, kind: input, shape index: {}]
  %s1 = inlined_call_operand.vmem [shape: f32[32,32], index: 1, kind: input, shape index: {}]
  %s2 = inlined_call_operand.vmem [shape: f32[32,16], index: 2, kind: input, shape index: {}]
  %s3 = inlined_call_operand.hbm [shape: f32[2,16,16], index: 3, kind: output, shape index: {}]
  %s4 = sld [smem:[#allocation0]]
  $region45: #{tpu_custom_call.1} parent=0
    _
  %s6 = ssub.s32 1, %s4
  %s7 = scalar_select 0, %s6, %s4
  $region1: #{tpu_custom_call.1} parent=0
    #allocation2 [shape = 'u8[16384]{0}', space=vmem, size = 0x4000, scoped, tag = 'output window, operand 0']
    #allocation3 [shape = 's32[2]{0}', space=sflag, size = 0x8, scoped, tag = 'scoped memory for tpu_custom_call.1']
    %8 = vsyncpa [#allocation3], 0
    %s9 = scalar_lea.sflag [#allocation3], 1
    %10 = vsyncpa %s9, 0
    loop: start=0, step=1, limit=4
    $region2: #{tpu_custom_call.1} parent=1 // loop_pre_header
      _
    $region3: #{tpu_custom_call.1} parent=1 // loop_header
      %s12 = sphi 0, %s16
      %p13 = scmp.ge.s32.totalorder %s12, 4
      %s22 = sphi 0, %s24
      %s25 = sphi 0, %s22
      %s26 = sphi 0, %s25
      %s42 = sphi 0, %s26
      %s46 = sphi 0, %s46
      %s48 = sphi 0, %s46
      %s49 = sphi 0, %s48
      %s63 = sphi 0, %s49
      %s67 = sphi 0, %s67
      %s69 = sphi 0, %s67
      %s70 = sphi 0, %s69
      %s84 = sphi 0, %s70
      %s90 = sphi 0, %s92
      %s93 = sphi 0, %s90
      %s94 = sphi 0, %s93
      %s110 = sphi 0, %s94
    $region4: #{tpu_custom_call.1} parent=1 // loop_header_branch
      %15 = sbr.rel (%p13) target = $region8
    $region5: #{tpu_custom_call.1} parent=1 // loop_body
      %s17 = ssub.s32 %s12, 1
      %s18 = ssub.s32 %s12, 2
      %s19 = sadd.s32 %s12, 1
      %s20 = ssub.s32 %s12, %s19
      %p21 = scmp.eq.s32.totalorder %s20, 0
      %s23 = sadd.s32 %s22, 1
      %s24 = scalar_select %p21, %s22, %s23
      %p27 = pneg %p21
      %p28 = scmp.eq.s32.totalorder %s12, 1
      %p29 = por %p27, %p28
      %p30 = scmp.ne.s32.totalorder %s22, %s25
      %p31 = scmp.eq.s32.totalorder %s12, 0
      %p32 = por %p30, %p31
      %p33 = scmp.ne.s32.totalorder %s22, %s25
      %p34 = scmp.eq.s32.totalorder %s17, 1
      %p35 = por %p33, %p34
      %p36 = scmp.ne.s32.totalorder %s25, %s26
      %p37 = scmp.eq.s32.totalorder %s17, 0
      %p38 = por %p36, %p37
      %p39 = scmp.ne.s32.totalorder %s25, %s26
      %p40 = scmp.eq.s32.totalorder %s18, 1
      %p41 = por %p39, %p40
      %p43 = scmp.ne.s32.totalorder %s26, %s42
      %p44 = scmp.eq.s32.totalorder %s18, 0
      %p45 = por %p43, %p44
      %s47 = sadd.s32 %s46, 1
      %p50 = scmp.eq.s32.totalorder %s12, 1
      %p51 = scmp.ne.s32.totalorder %s46, %s48
      %p52 = scmp.eq.s32.totalorder %s12, 0
      %p53 = por %p51, %p52
      %p54 = scmp.ne.s32.totalorder %s46, %s48
      %p55 = scmp.eq.s32.totalorder %s17, 1
      %p56 = por %p54, %p55
      %p57 = scmp.ne.s32.totalorder %s48, %s49
      %p58 = scmp.eq.s32.totalorder %s17, 0
      %p59 = por %p57, %p58
      %p60 = scmp.ne.s32.totalorder %s48, %s49
      %p61 = scmp.eq.s32.totalorder %s18, 1
      %p62 = por %p60, %p61
      %p64 = scmp.ne.s32.totalorder %s49, %s63
      %p65 = scmp.eq.s32.totalorder %s18, 0
      %p66 = por %p64, %p65
      %s68 = sadd.s32 %s67, 1
      %p71 = scmp.eq.s32.totalorder %s12, 1
      %p72 = scmp.ne.s32.totalorder %s67, %s69
      %p73 = scmp.eq.s32.totalorder %s12, 0
      %p74 = por %p72, %p73
      %p75 = scmp.ne.s32.totalorder %s67, %s69
      %p76 = scmp.eq.s32.totalorder %s17, 1
      %p77 = por %p75, %p76
      %p78 = scmp.ne.s32.totalorder %s69, %s70
      %p79 = scmp.eq.s32.totalorder %s17, 0
      %p80 = por %p78, %p79
      %p81 = scmp.ne.s32.totalorder %s69, %s70
      %p82 = scmp.eq.s32.totalorder %s18, 1
      %p83 = por %p81, %p82
      %p85 = scmp.ne.s32.totalorder %s70, %s84
      %p86 = scmp.eq.s32.totalorder %s18, 0
      %p87 = por %p85, %p86
      %s88 = ssub.s32 %s12, %s19
      %p89 = scmp.eq.s32.totalorder %s88, 0
      %s91 = sadd.s32 %s90, 1
      %s92 = scalar_select %p89, %s90, %s91
      %p95 = pneg %p89
      %p96 = scmp.eq.s32.totalorder %s12, 1
      %p97 = por %p95, %p96
      %p98 = scmp.ne.s32.totalorder %s90, %s93
      %p99 = scmp.eq.s32.totalorder %s12, 0
      %p100 = por %p98, %p99
      %p101 = scmp.ne.s32.totalorder %s90, %s93
      %p102 = scmp.eq.s32.totalorder %s17, 1
      %p103 = por %p101, %p102
      %p104 = scmp.ne.s32.totalorder %s93, %s94
      %p105 = scmp.eq.s32.totalorder %s17, 0
      %p106 = por %p104, %p105
      %p107 = scmp.ne.s32.totalorder %s93, %s94
      %p108 = scmp.eq.s32.totalorder %s18, 1
      %p109 = por %p107, %p108
      %p111 = scmp.ne.s32.totalorder %s94, %s110
      %p112 = scmp.eq.s32.totalorder %s18, 0
      %p113 = por %p111, %p112
      %p114 = scmp.le.s32.totalorder 1, %s12
      %p115 = scmp.lt.s32.totalorder %s12, 3
      %p116 = pnand %p114, %p115
      %p117 = pneg %p116
      // Predicated region
      $region9: #{tpu_custom_call.1} parent=5 // pred_check
        _
      $region10: #{tpu_custom_call.1} parent=5 // pred_check_branch
        %119 = sbr.rel (%p116) target = $region12
      $region11: #{tpu_custom_call.1} parent=5 // pred_region
        %s120 = ssub.s32 %s12, 1
        // Predicated region
        $region13: #{tpu_custom_call.1} parent=11 // pred_check
          %p121 = pneg %p59
        $region14: #{tpu_custom_call.1} parent=11 // pred_check_branch
          %123 = sbr.rel (%p121) target = $region16
        $region15: #{tpu_custom_call.1} parent=11 // pred_region
          _
        $region16: #{tpu_custom_call.1} parent=11 // pred_fallthru
          _
        // Predicated region
        $region17: #{tpu_custom_call.1} parent=11 // pred_check
          %p124 = pneg %p80
        $region18: #{tpu_custom_call.1} parent=11 // pred_check_branch
          %126 = sbr.rel (%p124) target = $region20
        $region19: #{tpu_custom_call.1} parent=11 // pred_region
          _
        $region20: #{tpu_custom_call.1} parent=11 // pred_fallthru
          _
      $region12: #{tpu_custom_call.1} parent=5 // pred_fallthru
        _
      %p127 = scmp.lt.s32.totalorder %s12, 2
      // Predicated region
      $region21: #{tpu_custom_call.1} parent=5 // pred_check
        %p128 = pneg %p127
      $region22: #{tpu_custom_call.1} parent=5 // pred_check_branch
        %130 = sbr.rel (%p128) target = $region24
      $region23: #{tpu_custom_call.1} parent=5 // pred_region
        // Predicated region
        $region25: #{tpu_custom_call.1} parent=23 // pred_check
          %p131 = pneg %p32
        $region26: #{tpu_custom_call.1} parent=23 // pred_check_branch
          %133 = sbr.rel (%p131) target = $region28
        $region27: #{tpu_custom_call.1} parent=23 // pred_region
          %s134 = smul.u32 8, %s12
          %p135 = scmp.lt.s32.totalorder %s134, 15
          %s136 = scalar_select %p135, %s134, 15
          %s137 = smul.addr %s136, 8
          %s138 = scalar_lea.vmem %s0, %s137
          %s139 = smul.u32 8, %s12
        $region28: #{tpu_custom_call.1} parent=23 // pred_fallthru
          _
      $region24: #{tpu_custom_call.1} parent=5 // pred_fallthru
        _
      %p140 = scmp.le.s32.totalorder 1, %s12
      %p141 = scmp.lt.s32.totalorder %s12, 3
      %p142 = pnand %p140, %p141
      %p143 = pneg %p142
      // Predicated region
      $region29: #{tpu_custom_call.1} parent=5 // pred_check
        _
      $region30: #{tpu_custom_call.1} parent=5 // pred_check_branch
        %145 = sbr.rel (%p142) target = $region32
      $region31: #{tpu_custom_call.1} parent=5 // pred_region
        %s146 = ssub.s32 %s12, 1
        %s147 = smul.u32 8, %s17
        %p148 = scmp.lt.s32.totalorder %s147, 15
        %s149 = scalar_select %p148, %s147, 15
        %s150 = smul.addr %s149, 8
        %s151 = scalar_lea.vmem %s0, %s150
        %p152 = pneg %p38
        %p153 = pneg %p35
        %p154 = pneg %p59
        %p155 = pneg %p56
        %p156 = pneg %p80
        %p157 = pneg %p77
        %p158 = pneg %p106
        %p159 = pneg %p103
        %s160 = sand.u32 %s93, 1
        %s161 = scalar_lea.sflag [#allocation3], %s160
        %s162 = sand.u32 %s93, 1
        %s163 = smul.addr %s162, 16
        %s164 = scalar_lea.vmem [#allocation2], %s163
        %s165 = smul.u32 8, %s17
        %p166 = scmp.lt.s32.totalorder %s165, 15
        %s167 = scalar_select %p166, %s165, 15
        %s168 = smul.addr %s167, 8
        %s169 = scalar_lea.vmem %s0, %s168
        %s170 = smul.u32 8, %s17
        %v171 = vld [vmem:[%s169] sm:$0xff]
        %v172 = vld [vmem:[%s169 + $0x8] sm:$0xff]
        %v173 = vld [vmem:[%s169 + $0x10] sm:$0xff]
        %v174 = vld [vmem:[%s169 + $0x18] sm:$0xff]
        %v175 = vld [vmem:[%s169 + $0x20] sm:$0xff]
        %v176 = vld [vmem:[%s169 + $0x28] sm:$0xff]
        %v177 = vld [vmem:[%s169 + $0x30] sm:$0xff]
        %v178 = vld [vmem:[%s169 + $0x38] sm:$0xff]
        %v179 = vld [vmem:[%s1] sm:$0xff]
        %v180 = vld [vmem:[%s1 + $0x8] sm:$0xff]
        %v181 = vld [vmem:[%s1 + $0x10] sm:$0xff]
        %v182 = vld [vmem:[%s1 + $0x18] sm:$0xff]
        %vm183 = vcmask 261120
        %v185 = vsel %vm183, %v171, 0
        %v188 = vsel %vm183, %v172, 0
        %v191 = vsel %vm183, %v173, 0
        %v194 = vsel %vm183, %v174, 0
        %v197 = vsel %vm183, %v175, 0
        %v200 = vsel %vm183, %v176, 0
        %v203 = vsel %vm183, %v177, 0
        %v206 = vsel %vm183, %v178, 0
        %208 = vmatprep.subr.mxu0 0.0
        %209 = vmatpush1.msra.mxu0 %v179
        %210 = vmatprep.subr.mxu0 0.0
        %211 = vmatpush1.msra.mxu0 %v180
        %212 = vmatprep.subr.mxu0 0.0
        %213 = vmatpush1.msra.mxu0 %v181
        %214 = vmatprep.subr.mxu0 0.0
        %215 = vmatpush1.msra.mxu0 %v182
        %216 = vmatprep.subr.mxu0 0.0
        %217 = vmatpush1.msra.mxu0 0.0
        %218 = vmatprep.subr.mxu0 0.0
        %219 = vmatpush1.msra.mxu0 0.0
        %220 = vmatprep.subr.mxu0 0.0
        %221 = vmatpush1.msra.mxu0 0.0
        %222 = vmatprep.subr.mxu0 0.0
        %223 = vmatpush1.msra.mxu0 0.0
        %224 = vmatprep.subr.mxu0 0.0
        %225 = vmatpush1.msra.mxu0 0.0
        %226 = vmatprep.subr.mxu0 0.0
        %227 = vmatpush1.msra.mxu0 0.0
        %228 = vmatprep.subr.mxu0 0.0
        %229 = vmatpush1.msra.mxu0 0.0
        %230 = vmatprep.subr.mxu0 0.0
        %231 = vmatpush1.msra.mxu0 0.0
        %232 = vmatprep.subr.mxu0 0.0
        %233 = vmatpush1.msra.mxu0 0.0
        %234 = vmatprep.subr.mxu0 0.0
        %235 = vmatpush1.msra.mxu0 0.0
        %236 = vmatprep.subr.mxu0 0.0
        %237 = vmatpush1.msra.mxu0 0.0
        %238 = vmatprep.subr.mxu0 0.0
        %239 = vmatpush1.msra.mxu0 0.0
        %240 = vmatprep.subr.mxu0 0.0
        %241 = vmatpush1.msra.mxu0 0.0
        %242 = vmatprep.subr.mxu0 0.0
        %243 = vmatpush1.msra.mxu0 0.0
        %244 = vmatprep.subr.mxu0 0.0
        %245 = vmatpush1.msra.mxu0 0.0
        %246 = vmatprep.subr.mxu0 0.0
        %247 = vmatpush1.msra.mxu0 0.0
        %248 = vmatprep.subr.mxu0 0.0
        %249 = vmatpush1.msra.mxu0 0.0
        %250 = vmatprep.subr.mxu0 0.0
        %251 = vmatpush1.msra.mxu0 0.0
        %252 = vmatprep.subr.mxu0 0.0
        %253 = vmatpush1.msra.mxu0 0.0
        %254 = vmatprep.subr.mxu0 0.0
        %255 = vmatpush1.msra.mxu0 0.0
        %256 = vmatprep.subr.mxu0 0.0
        %257 = vmatpush1.msra.mxu0 0.0
        %258 = vmatprep.subr.mxu0 0.0
        %259 = vmatpush1.msra.mxu0 0.0
        %260 = vmatprep.subr.mxu0 0.0
        %261 = vmatpush1.msra.mxu0 0.0
        %262 = vmatprep.subr.mxu0 0.0
        %263 = vmatpush1.msra.mxu0 0.0
        %264 = vmatprep.subr.mxu0 0.0
        %265 = vmatpush1.msra.mxu0 0.0
        %266 = vmatprep.subr.mxu0 0.0
        %267 = vmatpush1.msra.mxu0 0.0
        %268 = vmatprep.subr.mxu0 0.0
        %269 = vmatpush1.msra.mxu0 0.0
        %270 = vmatprep.subr.mxu0 0.0
        %271 = vmatpush1.msra.mxu0 0.0
        %272 = vmatprep.mubr.f32.mxu0 0.0
        %273 = vmatmul.mubr.f32.gmra.mrb[0].mxu0 %v185
        %v274 = vpop.f32.mrb[0].mxu0
        %v275 = vadd.f32 0.0, %v274
        %v276 = vpop.f32.mrb[0].mxu0
        %277 = vmatprep.mubr.f32.mxu0 0.0
        %278 = vmatmul.mubr.f32.gmra.mrb[0].mxu0 %v188
        %v279 = vpop.f32.mrb[0].mxu0
        %v280 = vadd.f32 0.0, %v279
        %v281 = vpop.f32.mrb[0].mxu0
        %282 = vmatprep.mubr.f32.mxu0 0.0
        %283 = vmatmul.mubr.f32.gmra.mrb[0].mxu0 %v191
        %v284 = vpop.f32.mrb[0].mxu0
        %v285 = vadd.f32 0.0, %v284
        %v286 = vpop.f32.mrb[0].mxu0
        %287 = vmatprep.mubr.f32.mxu0 0.0
        %288 = vmatmul.mubr.f32.gmra.mrb[0].mxu0 %v194
        %v289 = vpop.f32.mrb[0].mxu0
        %v290 = vadd.f32 0.0, %v289
        %v291 = vpop.f32.mrb[0].mxu0
        %292 = vmatprep.mubr.f32.mxu0 0.0
        %293 = vmatmul.mubr.f32.gmra.mrb[0].mxu0 %v197
        %v294 = vpop.f32.mrb[0].mxu0
        %v295 = vadd.f32 0.0, %v294
        %v296 = vpop.f32.mrb[0].mxu0
        %297 = vmatprep.mubr.f32.mxu0 0.0
        %298 = vmatmul.mubr.f32.gmra.mrb[0].mxu0 %v200
        %v299 = vpop.f32.mrb[0].mxu0
        %v300 = vadd.f32 0.0, %v299
        %v301 = vpop.f32.mrb[0].mxu0
        %302 = vmatprep.mubr.f32.mxu0 0.0
        %303 = vmatmul.mubr.f32.gmra.mrb[0].mxu0 %v203
        %v304 = vpop.f32.mrb[0].mxu0
        %v305 = vadd.f32 0.0, %v304
        %v306 = vpop.f32.mrb[0].mxu0
        %307 = vmatprep.mubr.f32.mxu0 0.0
        %308 = vmatmul.mubr.f32.gmra.mrb[0].mxu0 %v206
        %v309 = vpop.f32.mrb[0].mxu0
        %v310 = vadd.f32 0.0, %v309
        %v311 = vpop.f32.mrb[0].mxu0
        %312 = vdwg.mxu0
        %v313 = vld [vmem:[%s2] sm:$0xff]
        %v314 = vld [vmem:[%s2 + $0x8] sm:$0xff]
        %v315 = vld [vmem:[%s2 + $0x10] sm:$0xff]
        %v316 = vld [vmem:[%s2 + $0x18] sm:$0xff]
        %vm317 = vcmask 130048
        %v319 = vsel %vm317, %v313, 0
        %v322 = vsel %vm317, %v314, 0
        %v325 = vsel %vm317, %v315, 0
        %v328 = vsel %vm317, %v316, 0
        %330 = vmatprep.subr.mxu0 0.0
        %331 = vmatpush1.msra.mxu0 %v275
        %332 = vmatprep.subr.mxu0 0.0
        %333 = vmatpush1.msra.mxu0 %v280
        %334 = vmatprep.subr.mxu0 0.0
        %335 = vmatpush1.msra.mxu0 0.0
        %336 = vmatprep.subr.mxu0 0.0
        %337 = vmatpush1.msra.mxu0 0.0
        %338 = vmatprep.subr.mxu0 0.0
        %339 = vmatpush1.msra.mxu0 0.0
        %340 = vmatprep.subr.mxu0 0.0
        %341 = vmatpush1.msra.mxu0 0.0
        %342 = vmatprep.subr.mxu0 0.0
        %343 = vmatpush1.msra.mxu0 0.0
        %344 = vmatprep.subr.mxu0 0.0
        %345 = vmatpush1.msra.mxu0 0.0
        %346 = vmatprep.subr.mxu0 0.0
        %347 = vmatpush1.msra.mxu0 0.0
        %348 = vmatprep.subr.mxu0 0.0
        %349 = vmatpush1.msra.mxu0 0.0
        %350 = vmatprep.subr.mxu0 0.0
        %351 = vmatpush1.msra.mxu0 0.0
        %352 = vmatprep.subr.mxu0 0.0
        %353 = vmatpush1.msra.mxu0 0.0
        %354 = vmatprep.subr.mxu0 0.0
        %355 = vmatpush1.msra.mxu0 0.0
        %356 = vmatprep.subr.mxu0 0.0
        %357 = vmatpush1.msra.mxu0 0.0
        %358 = vmatprep.subr.mxu0 0.0
        %359 = vmatpush1.msra.mxu0 0.0
        %360 = vmatprep.subr.mxu0 0.0
        %361 = vmatpush1.msra.mxu0 0.0
        %362 = vmatprep.subr.mxu0 0.0
        %363 = vmatpush1.msra.mxu0 0.0
        %364 = vmatprep.subr.mxu0 0.0
        %365 = vmatpush1.msra.mxu0 0.0
        %366 = vmatprep.subr.mxu0 0.0
        %367 = vmatpush1.msra.mxu0 0.0
        %368 = vmatprep.subr.mxu0 0.0
        %369 = vmatpush1.msra.mxu0 0.0
        %370 = vmatprep.subr.mxu0 0.0
        %371 = vmatpush1.msra.mxu0 0.0
        %372 = vmatprep.subr.mxu0 0.0
        %373 = vmatpush1.msra.mxu0 0.0
        %374 = vmatprep.subr.mxu0 0.0
        %375 = vmatpush1.msra.mxu0 0.0
        %376 = vmatprep.subr.mxu0 0.0
        %377 = vmatpush1.msra.mxu0 0.0
        %378 = vmatprep.subr.mxu0 0.0
        %379 = vmatpush1.msra.mxu0 0.0
        %380 = vmatprep.subr.mxu0 0.0
        %381 = vmatpush1.msra.mxu0 0.0
        %382 = vmatprep.subr.mxu0 0.0
        %383 = vmatpush1.msra.mxu0 0.0
        %384 = vmatprep.subr.mxu0 0.0
        %385 = vmatpush1.msra.mxu0 0.0
        %386 = vmatprep.subr.mxu0 0.0
        %387 = vmatpush1.msra.mxu0 0.0
        %388 = vmatprep.subr.mxu0 0.0
        %389 = vmatpush1.msra.mxu0 0.0
        %390 = vmatprep.subr.mxu0 0.0
        %391 = vmatpush1.msra.mxu0 0.0
        %392 = vmatprep.subr.mxu0 0.0
        %393 = vmatpush1.msra.mxu0 0.0
        %394 = vmatprep.mubr.f32.mxu0 0.0
        %395 = vmatmul.mubr.f32.gmra.mrb[0].mxu0 %v319
        %v396 = vpop.f32.mrb[0].mxu0
        %v397 = vadd.f32 0.0, %v396
        %v398 = vpop.f32.mrb[0].mxu0
        %399 = vmatprep.mubr.f32.mxu0 0.0
        %400 = vmatmul.mubr.f32.gmra.mrb[0].mxu0 %v322
        %v401 = vpop.f32.mrb[0].mxu0
        %v402 = vadd.f32 0.0, %v401
        %v403 = vpop.f32.mrb[0].mxu0
        %404 = vmatprep.mubr.f32.mxu0 0.0
        %405 = vmatmul.mubr.f32.gmra.mrb[0].mxu0 %v325
        %v406 = vpop.f32.mrb[0].mxu0
        %v407 = vadd.f32 0.0, %v406
        %v408 = vpop.f32.mrb[0].mxu0
        %409 = vmatprep.mubr.f32.mxu0 0.0
        %410 = vmatmul.mubr.f32.gmra.mrb[0].mxu0 %v328
        %v411 = vpop.f32.mrb[0].mxu0
        %v412 = vadd.f32 0.0, %v411
        %v413 = vpop.f32.mrb[0].mxu0
        %414 = vdwg.mxu0
        %417 = vrot.lane.b32.xlu0 %v407, 112
        %v418 = vpop.permute.xlu0 %417
        %419 = vrot.lane.b32.xlu0 %v412, 112
        %v420 = vpop.permute.xlu0 %419
        %v423 = vsub.f32 %v397, %v418
        %v424 = vsub.f32 %v402, %v420
        %427 = vrot.lane.b32.xlu0 %v397, 112
        %v428 = vpop.permute.xlu0 %427
        %429 = vrot.lane.b32.xlu0 %v402, 112
        %v430 = vpop.permute.xlu0 %429
        %v433 = vadd.f32 %v407, %v428
        %v434 = vadd.f32 %v412, %v430
        %v435 = vmul.f32 %v423, %v423
        %v436 = vmul.f32 %v424, %v424
        %v437 = vadd.f32 %v435, 0.0
        %v438 = vadd.f32 %v436, 0.0
        %v439 = vmul.f32 %v433, %v433
        %v440 = vmul.f32 %v434, %v434
        %v441 = vadd.f32 %v437, %v439
        %v442 = vadd.f32 %v438, %v440
        %443 = vmatprep.subr.mxu0 0.0
        %444 = vmatpush1.msra.mxu0 %v285
        %445 = vmatprep.subr.mxu0 0.0
        %446 = vmatpush1.msra.mxu0 %v290
        %447 = vmatprep.subr.mxu0 0.0
        %448 = vmatpush1.msra.mxu0 0.0
        %449 = vmatprep.subr.mxu0 0.0
        %450 = vmatpush1.msra.mxu0 0.0
        %451 = vmatprep.subr.mxu0 0.0
        %452 = vmatpush1.msra.mxu0 0.0
        %453 = vmatprep.subr.mxu0 0.0
        %454 = vmatpush1.msra.mxu0 0.0
        %455 = vmatprep.subr.mxu0 0.0
        %456 = vmatpush1.msra.mxu0 0.0
        %457 = vmatprep.subr.mxu0 0.0
        %458 = vmatpush1.msra.mxu0 0.0
        %459 = vmatprep.subr.mxu0 0.0
        %460 = vmatpush1.msra.mxu0 0.0
        %461 = vmatprep.subr.mxu0 0.0
        %462 = vmatpush1.msra.mxu0 0.0
        %463 = vmatprep.subr.mxu0 0.0
        %464 = vmatpush1.msra.mxu0 0.0
        %465 = vmatprep.subr.mxu0 0.0
        %466 = vmatpush1.msra.mxu0 0.0
        %467 = vmatprep.subr.mxu0 0.0
        %468 = vmatpush1.msra.mxu0 0.0
        %469 = vmatprep.subr.mxu0 0.0
        %470 = vmatpush1.msra.mxu0 0.0
        %471 = vmatprep.subr.mxu0 0.0
        %472 = vmatpush1.msra.mxu0 0.0
        %473 = vmatprep.subr.mxu0 0.0
        %474 = vmatpush1.msra.mxu0 0.0
        %475 = vmatprep.subr.mxu0 0.0
        %476 = vmatpush1.msra.mxu0 0.0
        %477 = vmatprep.subr.mxu0 0.0
        %478 = vmatpush1.msra.mxu0 0.0
        %479 = vmatprep.subr.mxu0 0.0
        %480 = vmatpush1.msra.mxu0 0.0
        %481 = vmatprep.subr.mxu0 0.0
        %482 = vmatpush1.msra.mxu0 0.0
        %483 = vmatprep.subr.mxu0 0.0
        %484 = vmatpush1.msra.mxu0 0.0
        %485 = vmatprep.subr.mxu0 0.0
        %486 = vmatpush1.msra.mxu0 0.0
        %487 = vmatprep.subr.mxu0 0.0
        %488 = vmatpush1.msra.mxu0 0.0
        %489 = vmatprep.subr.mxu0 0.0
        %490 = vmatpush1.msra.mxu0 0.0
        %491 = vmatprep.subr.mxu0 0.0
        %492 = vmatpush1.msra.mxu0 0.0
        %493 = vmatprep.subr.mxu0 0.0
        %494 = vmatpush1.msra.mxu0 0.0
        %495 = vmatprep.subr.mxu0 0.0
        %496 = vmatpush1.msra.mxu0 0.0
        %497 = vmatprep.subr.mxu0 0.0
        %498 = vmatpush1.msra.mxu0 0.0
        %499 = vmatprep.subr.mxu0 0.0
        %500 = vmatpush1.msra.mxu0 0.0
        %501 = vmatprep.subr.mxu0 0.0
        %502 = vmatpush1.msra.mxu0 0.0
        %503 = vmatprep.subr.mxu0 0.0
        %504 = vmatpush1.msra.mxu0 0.0
        %505 = vmatprep.subr.mxu0 0.0
        %506 = vmatpush1.msra.mxu0 0.0
        %507 = vmatprep.mubr.f32.mxu0 0.0
        %508 = vmatmul.mubr.f32.gmra.mrb[0].mxu0 %v319
        %v509 = vpop.f32.mrb[0].mxu0
        %v510 = vadd.f32 0.0, %v509
        %v511 = vpop.f32.mrb[0].mxu0
        %512 = vmatprep.mubr.f32.mxu0 0.0
        %513 = vmatmul.mubr.f32.gmra.mrb[0].mxu0 %v322
        %v514 = vpop.f32.mrb[0].mxu0
        %v515 = vadd.f32 0.0, %v514
        %v516 = vpop.f32.mrb[0].mxu0
        %517 = vmatprep.mubr.f32.mxu0 0.0
        %518 = vmatmul.mubr.f32.gmra.mrb[0].mxu0 %v325
        %v519 = vpop.f32.mrb[0].mxu0
        %v520 = vadd.f32 0.0, %v519
        %v521 = vpop.f32.mrb[0].mxu0
        %522 = vmatprep.mubr.f32.mxu0 0.0
        %523 = vmatmul.mubr.f32.gmra.mrb[0].mxu0 %v328
        %v524 = vpop.f32.mrb[0].mxu0
        %v525 = vadd.f32 0.0, %v524
        %v526 = vpop.f32.mrb[0].mxu0
        %527 = vdwg.mxu0
        %530 = vrot.lane.b32.xlu0 %v520, 112
        %v531 = vpop.permute.xlu0 %530
        %532 = vrot.lane.b32.xlu0 %v525, 112
        %v533 = vpop.permute.xlu0 %532
        %v536 = vsub.f32 %v510, %v531
        %v537 = vsub.f32 %v515, %v533
        %540 = vrot.lane.b32.xlu0 %v510, 112
        %v541 = vpop.permute.xlu0 %540
        %542 = vrot.lane.b32.xlu0 %v515, 112
        %v543 = vpop.permute.xlu0 %542
        %v546 = vadd.f32 %v520, %v541
        %v547 = vadd.f32 %v525, %v543
        %v548 = vmul.f32 %v536, %v536
        %v549 = vmul.f32 %v537, %v537
        %v550 = vadd.f32 %v441, %v548
        %v551 = vadd.f32 %v442, %v549
        %v552 = vmul.f32 %v546, %v546
        %v553 = vmul.f32 %v547, %v547
        %v554 = vadd.f32 %v550, %v552
        %v555 = vadd.f32 %v551, %v553
        %556 = vmatprep.subr.mxu0 0.0
        %557 = vmatpush1.msra.mxu0 %v295
        %558 = vmatprep.subr.mxu0 0.0
        %559 = vmatpush1.msra.mxu0 %v300
        %560 = vmatprep.subr.mxu0 0.0
        %561 = vmatpush1.msra.mxu0 0.0
        %562 = vmatprep.subr.mxu0 0.0
        %563 = vmatpush1.msra.mxu0 0.0
        %564 = vmatprep.subr.mxu0 0.0
        %565 = vmatpush1.msra.mxu0 0.0
        %566 = vmatprep.subr.mxu0 0.0
        %567 = vmatpush1.msra.mxu0 0.0
        %568 = vmatprep.subr.mxu0 0.0
        %569 = vmatpush1.msra.mxu0 0.0
        %570 = vmatprep.subr.mxu0 0.0
        %571 = vmatpush1.msra.mxu0 0.0
        %572 = vmatprep.subr.mxu0 0.0
        %573 = vmatpush1.msra.mxu0 0.0
        %574 = vmatprep.subr.mxu0 0.0
        %575 = vmatpush1.msra.mxu0 0.0
        %576 = vmatprep.subr.mxu0 0.0
        %577 = vmatpush1.msra.mxu0 0.0
        %578 = vmatprep.subr.mxu0 0.0
        %579 = vmatpush1.msra.mxu0 0.0
        %580 = vmatprep.subr.mxu0 0.0
        %581 = vmatpush1.msra.mxu0 0.0
        %582 = vmatprep.subr.mxu0 0.0
        %583 = vmatpush1.msra.mxu0 0.0
        %584 = vmatprep.subr.mxu0 0.0
        %585 = vmatpush1.msra.mxu0 0.0
        %586 = vmatprep.subr.mxu0 0.0
        %587 = vmatpush1.msra.mxu0 0.0
        %588 = vmatprep.subr.mxu0 0.0
        %589 = vmatpush1.msra.mxu0 0.0
        %590 = vmatprep.subr.mxu0 0.0
        %591 = vmatpush1.msra.mxu0 0.0
        %592 = vmatprep.subr.mxu0 0.0
        %593 = vmatpush1.msra.mxu0 0.0
        %594 = vmatprep.subr.mxu0 0.0
        %595 = vmatpush1.msra.mxu0 0.0
        %596 = vmatprep.subr.mxu0 0.0
        %597 = vmatpush1.msra.mxu0 0.0
        %598 = vmatprep.subr.mxu0 0.0
        %599 = vmatpush1.msra.mxu0 0.0
        %600 = vmatprep.subr.mxu0 0.0
        %601 = vmatpush1.msra.mxu0 0.0
        %602 = vmatprep.subr.mxu0 0.0
        %603 = vmatpush1.msra.mxu0 0.0
        %604 = vmatprep.subr.mxu0 0.0
        %605 = vmatpush1.msra.mxu0 0.0
        %606 = vmatprep.subr.mxu0 0.0
        %607 = vmatpush1.msra.mxu0 0.0
        %608 = vmatprep.subr.mxu0 0.0
        %609 = vmatpush1.msra.mxu0 0.0
        %610 = vmatprep.subr.mxu0 0.0
        %611 = vmatpush1.msra.mxu0 0.0
        %612 = vmatprep.subr.mxu0 0.0
        %613 = vmatpush1.msra.mxu0 0.0
        %614 = vmatprep.subr.mxu0 0.0
        %615 = vmatpush1.msra.mxu0 0.0
        %616 = vmatprep.subr.mxu0 0.0
        %617 = vmatpush1.msra.mxu0 0.0
        %618 = vmatprep.subr.mxu0 0.0
        %619 = vmatpush1.msra.mxu0 0.0
        %620 = vmatprep.mubr.f32.mxu0 0.0
        %621 = vmatmul.mubr.f32.gmra.mrb[0].mxu0 %v319
        %v622 = vpop.f32.mrb[0].mxu0
        %v623 = vadd.f32 0.0, %v622
        %v624 = vpop.f32.mrb[0].mxu0
        %625 = vmatprep.mubr.f32.mxu0 0.0
        %626 = vmatmul.mubr.f32.gmra.mrb[0].mxu0 %v322
        %v627 = vpop.f32.mrb[0].mxu0
        %v628 = vadd.f32 0.0, %v627
        %v629 = vpop.f32.mrb[0].mxu0
        %630 = vmatprep.mubr.f32.mxu0 0.0
        %631 = vmatmul.mubr.f32.gmra.mrb[0].mxu0 %v325
        %v632 = vpop.f32.mrb[0].mxu0
        %v633 = vadd.f32 0.0, %v632
        %v634 = vpop.f32.mrb[0].mxu0
        %635 = vmatprep.mubr.f32.mxu0 0.0
        %636 = vmatmul.mubr.f32.gmra.mrb[0].mxu0 %v328
        %v637 = vpop.f32.mrb[0].mxu0
        %v638 = vadd.f32 0.0, %v637
        %v639 = vpop.f32.mrb[0].mxu0
        %640 = vdwg.mxu0
        %643 = vrot.lane.b32.xlu0 %v633, 112
        %v644 = vpop.permute.xlu0 %643
        %645 = vrot.lane.b32.xlu0 %v638, 112
        %v646 = vpop.permute.xlu0 %645
        %v649 = vsub.f32 %v623, %v644
        %v650 = vsub.f32 %v628, %v646
        %653 = vrot.lane.b32.xlu0 %v623, 112
        %v654 = vpop.permute.xlu0 %653
        %655 = vrot.lane.b32.xlu0 %v628, 112
        %v656 = vpop.permute.xlu0 %655
        %v659 = vadd.f32 %v633, %v654
        %v660 = vadd.f32 %v638, %v656
        %v661 = vmul.f32 %v649, %v649
        %v662 = vmul.f32 %v650, %v650
        %v663 = vadd.f32 %v554, %v661
        %v664 = vadd.f32 %v555, %v662
        %v665 = vmul.f32 %v659, %v659
        %v666 = vmul.f32 %v660, %v660
        %v667 = vadd.f32 %v663, %v665
        %v668 = vadd.f32 %v664, %v666
        %669 = vmatprep.subr.mxu0 0.0
        %670 = vmatpush1.msra.mxu0 %v305
        %671 = vmatprep.subr.mxu0 0.0
        %672 = vmatpush1.msra.mxu0 %v310
        %673 = vmatprep.subr.mxu0 0.0
        %674 = vmatpush1.msra.mxu0 0.0
        %675 = vmatprep.subr.mxu0 0.0
        %676 = vmatpush1.msra.mxu0 0.0
        %677 = vmatprep.subr.mxu0 0.0
        %678 = vmatpush1.msra.mxu0 0.0
        %679 = vmatprep.subr.mxu0 0.0
        %680 = vmatpush1.msra.mxu0 0.0
        %681 = vmatprep.subr.mxu0 0.0
        %682 = vmatpush1.msra.mxu0 0.0
        %683 = vmatprep.subr.mxu0 0.0
        %684 = vmatpush1.msra.mxu0 0.0
        %685 = vmatprep.subr.mxu0 0.0
        %686 = vmatpush1.msra.mxu0 0.0
        %687 = vmatprep.subr.mxu0 0.0
        %688 = vmatpush1.msra.mxu0 0.0
        %689 = vmatprep.subr.mxu0 0.0
        %690 = vmatpush1.msra.mxu0 0.0
        %691 = vmatprep.subr.mxu0 0.0
        %692 = vmatpush1.msra.mxu0 0.0
        %693 = vmatprep.subr.mxu0 0.0
        %694 = vmatpush1.msra.mxu0 0.0
        %695 = vmatprep.subr.mxu0 0.0
        %696 = vmatpush1.msra.mxu0 0.0
        %697 = vmatprep.subr.mxu0 0.0
        %698 = vmatpush1.msra.mxu0 0.0
        %699 = vmatprep.subr.mxu0 0.0
        %700 = vmatpush1.msra.mxu0 0.0
        %701 = vmatprep.subr.mxu0 0.0
        %702 = vmatpush1.msra.mxu0 0.0
        %703 = vmatprep.subr.mxu0 0.0
        %704 = vmatpush1.msra.mxu0 0.0
        %705 = vmatprep.subr.mxu0 0.0
        %706 = vmatpush1.msra.mxu0 0.0
        %707 = vmatprep.subr.mxu0 0.0
        %708 = vmatpush1.msra.mxu0 0.0
        %709 = vmatprep.subr.mxu0 0.0
        %710 = vmatpush1.msra.mxu0 0.0
        %711 = vmatprep.subr.mxu0 0.0
        %712 = vmatpush1.msra.mxu0 0.0
        %713 = vmatprep.subr.mxu0 0.0
        %714 = vmatpush1.msra.mxu0 0.0
        %715 = vmatprep.subr.mxu0 0.0
        %716 = vmatpush1.msra.mxu0 0.0
        %717 = vmatprep.subr.mxu0 0.0
        %718 = vmatpush1.msra.mxu0 0.0
        %719 = vmatprep.subr.mxu0 0.0
        %720 = vmatpush1.msra.mxu0 0.0
        %721 = vmatprep.subr.mxu0 0.0
        %722 = vmatpush1.msra.mxu0 0.0
        %723 = vmatprep.subr.mxu0 0.0
        %724 = vmatpush1.msra.mxu0 0.0
        %725 = vmatprep.subr.mxu0 0.0
        %726 = vmatpush1.msra.mxu0 0.0
        %727 = vmatprep.subr.mxu0 0.0
        %728 = vmatpush1.msra.mxu0 0.0
        %729 = vmatprep.subr.mxu0 0.0
        %730 = vmatpush1.msra.mxu0 0.0
        %731 = vmatprep.subr.mxu0 0.0
        %732 = vmatpush1.msra.mxu0 0.0
        %733 = vmatprep.mubr.f32.mxu0 0.0
        %734 = vmatmul.mubr.f32.gmra.mrb[0].mxu0 %v319
        %v735 = vpop.f32.mrb[0].mxu0
        %v736 = vadd.f32 0.0, %v735
        %v737 = vpop.f32.mrb[0].mxu0
        %738 = vmatprep.mubr.f32.mxu0 0.0
        %739 = vmatmul.mubr.f32.gmra.mrb[0].mxu0 %v322
        %v740 = vpop.f32.mrb[0].mxu0
        %v741 = vadd.f32 0.0, %v740
        %v742 = vpop.f32.mrb[0].mxu0
        %743 = vmatprep.mubr.f32.mxu0 0.0
        %744 = vmatmul.mubr.f32.gmra.mrb[0].mxu0 %v325
        %v745 = vpop.f32.mrb[0].mxu0
        %v746 = vadd.f32 0.0, %v745
        %v747 = vpop.f32.mrb[0].mxu0
        %748 = vmatprep.mubr.f32.mxu0 0.0
        %749 = vmatmul.mubr.f32.gmra.mrb[0].mxu0 %v328
        %v750 = vpop.f32.mrb[0].mxu0
        %v751 = vadd.f32 0.0, %v750
        %v752 = vpop.f32.mrb[0].mxu0
        %753 = vdwg.mxu0
        %756 = vrot.lane.b32.xlu0 %v746, 112
        %v757 = vpop.permute.xlu0 %756
        %758 = vrot.lane.b32.xlu0 %v751, 112
        %v759 = vpop.permute.xlu0 %758
        %v762 = vsub.f32 %v736, %v757
        %v763 = vsub.f32 %v741, %v759
        %766 = vrot.lane.b32.xlu0 %v736, 112
        %v767 = vpop.permute.xlu0 %766
        %768 = vrot.lane.b32.xlu0 %v741, 112
        %v769 = vpop.permute.xlu0 %768
        %v772 = vadd.f32 %v746, %v767
        %v773 = vadd.f32 %v751, %v769
        %v774 = vmul.f32 %v762, %v762
        %v775 = vmul.f32 %v763, %v763
        %v776 = vadd.f32 %v667, %v774
        %v777 = vadd.f32 %v668, %v775
        %v778 = vmul.f32 %v772, %v772
        %v779 = vmul.f32 %v773, %v773
        %v780 = vadd.f32 %v776, %v778
        %v781 = vadd.f32 %v777, %v779
        %v782 = vrsqrt.pop %v780
        %v783 = vmul.f32 %v780, %v782
        %vm784 = vcmp.eq.f32.partialorder %v780, inf
        %v785 = vsel %vm784, %v780, %v783
        %vm786 = vcmp.eq.f32.partialorder %v780, 0.0
        %v787 = vand.u32 %v780, 2147483648
        %v788 = vsel %vm786, %v787, %v785
        %v789 = vrsqrt.pop %v781
        %v790 = vmul.f32 %v781, %v789
        %vm791 = vcmp.eq.f32.partialorder %v781, inf
        %v792 = vsel %vm791, %v781, %v790
        %vm793 = vcmp.eq.f32.partialorder %v781, 0.0
        %v794 = vand.u32 %v781, 2147483648
        %v795 = vsel %vm793, %v794, %v792
        %796 = vst.msk [vmem:[%s164] sm:$0xff] %vm317, %v788
        %797 = vst.msk [vmem:[%s164 + $0x8] sm:$0xff] %vm317, %v795
        %s798 = sand.u32 %s93, 1
        %s799 = scalar_lea.sflag [#allocation3], %s798
        %s800 = sand.u32 %s93, 1
        %s801 = smul.addr %s800, 16
        %s802 = scalar_lea.vmem [#allocation2], %s801
        // Predicated region
        $region33: #{tpu_custom_call.1} parent=31 // pred_check
          %p803 = pneg %p103
        $region34: #{tpu_custom_call.1} parent=31 // pred_check_branch
          %805 = sbr.rel (%p803) target = $region36
        $region35: #{tpu_custom_call.1} parent=31 // pred_region
          %s807 = ssub.s32 256, 256
          %808 = vsyncadd %s799, %s807
          %s809 = smul.addr %s17, 2
          %s810 = smul.addr %s809, 128
          %s811 = scalar_lea.hbm %s3, %s810
          %s812 = sshll.u32 %s802, 4
          %s813 = int_to_ptr.vmem [resolvable:$true] %s812
          %818 = dma.vmem_to_hbm [thread:$0]  %s813, 256, %s811, %s799, 128, 128, 8
        $region36: #{tpu_custom_call.1} parent=31 // pred_fallthru
          _
      $region32: #{tpu_custom_call.1} parent=5 // pred_fallthru
        _
      %p819 = scmp.le.s32.totalorder 2, %s12
      // Predicated region
      $region37: #{tpu_custom_call.1} parent=5 // pred_check
        %p820 = pneg %p819
      $region38: #{tpu_custom_call.1} parent=5 // pred_check_branch
        %822 = sbr.rel (%p820) target = $region40
      $region39: #{tpu_custom_call.1} parent=5 // pred_region
        %s823 = ssub.s32 %s12, 2
        // Predicated region
        $region41: #{tpu_custom_call.1} parent=39 // pred_check
          %p824 = pneg %p109
        $region42: #{tpu_custom_call.1} parent=39 // pred_check_branch
          %826 = sbr.rel (%p824) target = $region44
        $region43: #{tpu_custom_call.1} parent=39 // pred_region
          %s827 = sand.u32 %s94, 1
          %s828 = scalar_lea.sflag [#allocation3], %s827
          %s829 = sand.u32 %s94, 1
          %s830 = smul.addr %s829, 16
          %s831 = scalar_lea.vmem [#allocation2], %s830
          %832 = dma.done %s828, 256
        $region44: #{tpu_custom_call.1} parent=39 // pred_fallthru
          _
      $region40: #{tpu_custom_call.1} parent=5 // pred_fallthru
        _
    $region6: #{tpu_custom_call.1} parent=1 // loop_footer
      %s16 = sadd.s32 1, %s12
    $region7: #{tpu_custom_call.1} parent=1 // loop_footer_branch
      %11 = sbr.rel target = $region3
    $region8: #{tpu_custom_call.1} parent=1 // loop_exit
      _
    %833 = vsyncpa [#allocation3], 1
    %s834 = scalar_lea.sflag [#allocation3], 1
    %835 = vsyncpa %s834, 1

</llo_original>
